<compile_context>
chip_gen: v7x
topology: tpu7x:2x2x1
jax: 0.10.0
libtpu: 0.0.40
codegen_flags: <defaults>
</compile_context>

<pallas_src>
import functools

import jax
import jax.numpy as jnp
from jax import lax
from jax.experimental import pallas as pl
from jax.experimental.pallas import tpu as pltpu

_SUBLANE = 8
_LANE = 128


def _round_down(x, m):
    return (x // m) * m


def _vmem_capacity_bytes():
    try:
        return int(pltpu.get_tpu_info().vmem_capacity_bytes)
    except Exception:
        return 64 * 1024 * 1024  # conservative (v7x-sized) fallback


def _refined_reciprocal(x):
    # EUP-seeded reciprocal + one Newton step on a tiny (tq, 1) vector -> ~f32 exact.
    r = pl.reciprocal(x, approx=True)
    return r * (2.0 - x * r)


def _auto_q_tile(Lq, fixed_bytes, per_row_bytes, vmem_budget, q_cap):
    """Largest q tile whose VMEM footprint (fixed + tq * per_row) fits the budget."""
    avail = max(vmem_budget - fixed_bytes, 0)
    tq = min(avail // max(per_row_bytes, 1), q_cap, Lq)
    if tq >= Lq:
        return Lq
    for mult in (256, 128, _SUBLANE):  # prefer MXU-friendly multiples (v6e/v7x MXU is 256-wide)
        if tq >= mult:
            return _round_down(tq, mult)
    return min(Lq, _SUBLANE)


# ---------------------------------------------------------------------------
# Exact kernel: full Lk resident per step (required when the attention matrix
# must be returned, or when Lk fits a single tile anyway).
# ---------------------------------------------------------------------------
def _sdpa_exact_kernel(*refs, inv_scale, use_mask, return_attention, mxu_dtype):
    if use_mask and return_attention:
        q_ref, k_ref, v_ref, mask_ref, out_ref, attn_ref = refs
    elif use_mask:
        q_ref, k_ref, v_ref, mask_ref, out_ref = refs
        attn_ref = None
    elif return_attention:
        q_ref, k_ref, v_ref, out_ref, attn_ref = refs
        mask_ref = None
    else:
        q_ref, k_ref, v_ref, out_ref = refs
        mask_ref = None
        attn_ref = None

    q = q_ref[0]            # (tq, D)
    k = k_ref[0]            # (Lk, D)
    v = v_ref[0]            # (Lk, Dv)

    # Fold 1/scale into Q (Lq*D multiplies instead of Lq*Lk); weak-typed scalar keeps dtype.
    if inv_scale is not None:
        q = q * inv_scale
    if mxu_dtype is not None:
        q = q.astype(mxu_dtype)
        k = k.astype(mxu_dtype)

    # scores = Q @ K^T via direct contraction of the shared last dim (no in-kernel transpose).
    scores = lax.dot_general(q, k, dimension_numbers=(((1,), (1,)), ((), ())),
                             preferred_element_type=jnp.float32)          # (tq, Lk)

    if use_mask:
        # Compare in the mask's stored dtype -- no (tq, Lk) int8/f32 unpack temporary.
        scores = jnp.where(mask_ref[0] == 0, jnp.float32(-1e9), scores)

    s_max = jnp.max(scores, axis=-1, keepdims=True)
    e = jnp.exp(scores - s_max)
    denom = jnp.sum(e, axis=-1, keepdims=True)                            # (tq, 1)
    r = _refined_reciprocal(denom)

    pv_dtype = mxu_dtype if mxu_dtype is not None else v.dtype
    if return_attention:
        attn = e * r                                                      # (tq, Lk)
        attn_ref[0] = attn.astype(attn_ref.dtype)
        out = jnp.dot(attn.astype(pv_dtype), v.astype(pv_dtype),
                      preferred_element_type=jnp.float32)
    else:
        # Normalize the (tq, Dv) output instead of the (tq, Lk) attention matrix.
        out = jnp.dot(e.astype(pv_dtype), v.astype(pv_dtype),
                      preferred_element_type=jnp.float32) * r
    out_ref[0] = out.astype(out_ref.dtype)


# ---------------------------------------------------------------------------
# Flash-style kernel: online softmax over Lk tiles (output-only path).
# ---------------------------------------------------------------------------
def _sdpa_flash_kernel(*refs, inv_scale, use_mask, mxu_dtype, Lk, tk):
    if use_mask:
        q_ref, k_ref, v_ref, mask_ref, out_ref, m_sc, l_sc, acc_sc = refs
    else:
        q_ref, k_ref, v_ref, out_ref, m_sc, l_sc, acc_sc = refs
        mask_ref = None

    kv = pl.program_id(2)

    @pl.when(kv == 0)
    def _():
        m_sc[...] = jnp.full_like(m_sc, -jnp.inf)
        l_sc[...] = jnp.zeros_like(l_sc)
        acc_sc[...] = jnp.zeros_like(acc_sc)

    q = q_ref[0]            # (tq, D)
    k = k_ref[0]            # (tk, D)
    v = v_ref[0]            # (tk, Dv)

    if inv_scale is not None:
        q = q * inv_scale
    if mxu_dtype is not None:
        q = q.astype(mxu_dtype)
        k = k.astype(mxu_dtype)

    s = lax.dot_general(q, k, dimension_numbers=(((1,), (1,)), ((), ())),
                        preferred_element_type=jnp.float32)               # (tq, tk)
    if use_mask:
        s = jnp.where(mask_ref[0] == 0, jnp.float32(-1e9), s)

    if Lk % tk != 0:
        # Last K/V tile is partial: kill out-of-bounds columns (scores -> -inf => p = 0)
        # and zero the OOB V rows so 0 * garbage(NaN) cannot poison the accumulator.
        col = kv * tk + lax.broadcasted_iota(jnp.int32, s.shape, 1)
        s = jnp.where(col < Lk, s, -jnp.inf)
        row = kv * tk + lax.broadcasted_iota(jnp.int32, (v.shape[0], 1), 0)
        v = jnp.where(row < Lk, v, jnp.zeros_like(v))

    m_prev = m_sc[...]
    m_new = jnp.maximum(m_prev, jnp.max(s, axis=-1, keepdims=True))
    alpha = jnp.exp(m_prev - m_new)
    p = jnp.exp(s - m_new)
    l_sc[...] = alpha * l_sc[...] + jnp.sum(p, axis=-1, keepdims=True)

    pv_dtype = mxu_dtype if mxu_dtype is not None else v.dtype
    acc_sc[...] = alpha * acc_sc[...] + jnp.dot(p.astype(pv_dtype), v.astype(pv_dtype),
                                                preferred_element_type=jnp.float32)
    m_sc[...] = m_new

    @pl.when(kv == pl.num_programs(2) - 1)
    def _():
        r = _refined_reciprocal(l_sc[...])
        out_ref[0] = (acc_sc[...] * r).astype(out_ref.dtype)


# ---------------------------------------------------------------------------
# Wrapper
# ---------------------------------------------------------------------------
def scaled_dot_product_attention(Q, K, V, scale=None, mask=None, *,
                                 return_attention=True,
                                 q_block=None, kv_block=512,
                                 attn_dtype=None, mxu_dtype=None):
    """Pallas TPU implementation of ScaledDotProductAttention.forward.

    Q: (B, Lq, D), K: (B, Lk, D), V: (B, Lk, Dv).
    scale: divisor for the scores (falsy == no scaling, matching torch's `if scale:`).
    mask (optional): viewable as (B, Lq, Lk); entries equal to 0 are masked (-1e9).
    return_attention=False skips the (B, Lq, Lk) writeback and, for Lk > kv_block,
    switches to a flash-style online-softmax path with VMEM independent of Lk.
    attn_dtype: optional dtype for the returned attention matrix (default Q.dtype).
    mxu_dtype: optional matmul-operand dtype (e.g. jnp.bfloat16); accumulation stays f32.
    Returns (output (B, Lq, Dv), attention or None).
    """
    B, Lq, D = Q.shape
    Bk, Lk, Dk = K.shape
    Bv, Lkv, Dv = V.shape
    assert Dk == D and Bk == B and Bv == B and Lkv == Lk

    inv_scale = (1.0 / float(scale)) if scale else None     # `if scale:` semantics
    use_mask = mask is not None

    in_bytes = jnp.dtype(Q.dtype).itemsize
    out_dtype = Q.dtype
    out_bytes = jnp.dtype(out_dtype).itemsize
    attn_out_dtype = jnp.dtype(attn_dtype) if attn_dtype is not None else jnp.dtype(Q.dtype)

    if use_mask:
        mask_arr = jnp.reshape(mask, (B, Lq, Lk))
        if mask_arr.dtype == jnp.bool_:
            mask_arr = mask_arr.astype(jnp.int8)  # 1 byte already; avoids bool-ref layouts
        mask_bytes = jnp.dtype(mask_arr.dtype).itemsize
    else:
        mask_arr = None
        mask_bytes = 0

    # Generation-aware VMEM budget: ~96 MiB on v5e/v6e (128 MiB phys), ~48 MiB on v7x (64 MiB).
    vmem_limit = min((_vmem_capacity_bytes() * 3) // 4, 100 * 1024 * 1024)
    q_cap = q_block if q_block is not None else 512

    kernel_common = dict(inv_scale=inv_scale, use_mask=use_mask, mxu_dtype=mxu_dtype)

    # ---------------- flash-style path (output only, Lk tiled) ----------------
    use_flash = (not return_attention) and (Lk > kv_block)
    if use_flash:
        align = _LANE if use_mask else _SUBLANE   # mask block's last dim must be lane-aligned
        tk = max(align, _round_down(min(kv_block, Lk), align))
        if tk >= Lk:
            use_flash = False

    if use_flash:
        fixed = 2 * tk * (D + Dv) * in_bytes                       # K/V double buffers
        per_row = (2 * D * in_bytes                                 # Q double buffer
                   + 2 * Dv * out_bytes                             # out double buffer
                   + (Dv + 2) * 4                                   # m/l/acc scratch
                   + 3 * tk * 4)                                    # score/p f32 temporaries
        if use_mask:
            per_row += 2 * tk * mask_bytes
        tq = _auto_q_tile(Lq, fixed, per_row, vmem_limit, q_cap)

        grid = (B, pl.cdiv(Lq, tq), pl.cdiv(Lk, tk))
        args = [Q, K, V]
        in_specs = [
            pl.BlockSpec((1, tq, D), lambda b, i, k: (b, i, 0)),
            pl.BlockSpec((1, tk, D), lambda b, i, k: (b, k, 0)),
            pl.BlockSpec((1, tk, Dv), lambda b, i, k: (b, k, 0)),
        ]
        if use_mask:
            args.append(mask_arr)
            in_specs.append(pl.BlockSpec((1, tq, tk), lambda b, i, k: (b, i, k)))

        kernel = functools.partial(_sdpa_flash_kernel, Lk=Lk, tk=tk, **kernel_common)
        grid_spec = pltpu.PrefetchScalarGridSpec(
            num_scalar_prefetch=0, grid=grid,
            in_specs=in_specs,
            out_specs=pl.BlockSpec((1, tq, Dv), lambda b, i, k: (b, i, 0)),
            scratch_shapes=[pltpu.VMEM((tq, 1), jnp.float32),
                            pltpu.VMEM((tq, 1), jnp.float32),
                            pltpu.VMEM((tq, Dv), jnp.float32)])
        out = pl.pallas_call(
            kernel,
            out_shape=jax.ShapeDtypeStruct((B, Lq, Dv), out_dtype),
            grid_spec=grid_spec,
            compiler_params=pltpu.CompilerParams(
                dimension_semantics=("parallel", "parallel", "arbitrary"),
                vmem_limit_bytes=vmem_limit),
        )(*args)
        return out, None

    # ---------------- exact path (full Lk resident per step) ----------------
    kv_nbuf = 2
    kv_pipeline = {}
    if 2 * Lk * (D + Dv) * in_bytes > vmem_limit // 3:
        # Full-Lk K/V double buffers would dominate VMEM: single-buffer them (their block
        # index is constant across the inner q axis, so only batch boundaries lose overlap).
        kv_nbuf = 1
        kv_pipeline = dict(pipeline_mode=pl.Buffered(1))

    fixed = kv_nbuf * Lk * (D + Dv) * in_bytes
    per_row = (2 * D * in_bytes                                     # Q double buffer
               + 2 * Dv * out_bytes                                 # out double buffer
               + 3 * Lk * 4)                                        # scores/exp f32 temporaries
    if return_attention:
        per_row += 2 * Lk * attn_out_dtype.itemsize                 # attn double buffer
    if use_mask:
        per_row += 2 * Lk * mask_bytes
    tq = _auto_q_tile(Lq, fixed, per_row, vmem_limit, q_cap)

    grid = (B, pl.cdiv(Lq, tq))
    args = [Q, K, V]
    in_specs = [
        pl.BlockSpec((1, tq, D), lambda b, i: (b, i, 0)),
        pl.BlockSpec((1, Lk, D), lambda b, i: (b, 0, 0), **kv_pipeline),
        pl.BlockSpec((1, Lk, Dv), lambda b, i: (b, 0, 0), **kv_pipeline),
    ]
    if use_mask:
        args.append(mask_arr)
        in_specs.append(pl.BlockSpec((1, tq, Lk), lambda b, i: (b, i, 0)))

    out_shape = [jax.ShapeDtypeStruct((B, Lq, Dv), out_dtype)]
    out_specs = [pl.BlockSpec((1, tq, Dv), lambda b, i: (b, i, 0))]
    if return_attention:
        out_shape.append(jax.ShapeDtypeStruct((B, Lq, Lk), attn_out_dtype))
        out_specs.append(pl.BlockSpec((1, tq, Lk), lambda b, i: (b, i, 0)))

    kernel = functools.partial(_sdpa_exact_kernel, return_attention=return_attention,
                               **kernel_common)
    grid_spec = pltpu.PrefetchScalarGridSpec(
        num_scalar_prefetch=0, grid=grid, in_specs=in_specs, out_specs=out_specs)

    results = pl.pallas_call(
        kernel,
        out_shape=tuple(out_shape),
        grid_spec=grid_spec,
        compiler_params=pltpu.CompilerParams(
            dimension_semantics=("parallel", "parallel"),
            vmem_limit_bytes=vmem_limit),
    )(*args)

    if return_attention:
        return results[0], results[1]
    return results[0], None


# ---------------------------------------------------------------------------
# Pure-JAX reference (mirrors the torch module)
# ---------------------------------------------------------------------------
def _reference(Q, K, V, scale=None, mask=None):
    scores = jnp.einsum("bqd,bkd->bqk", Q, K)
    if scale:
        scores = scores / scale
    if mask is not None:
        m = jnp.reshape(mask, scores.shape).astype(jnp.float32)
        scores = jnp.where(m == 0.0, -1e9, scores)
    attn = jax.nn.softmax(scores, axis=-1)
    out = jnp.einsum("bqk,bkd->bqd", attn, V)
    return out, attn


if __name__ == "__main__":
    key = jax.random.PRNGKey(0)
    kq, kk, kv_, km = jax.random.split(key, 4)

    B, Lq, Lk, D = 2, 8, 8, 32
    Q = jax.random.normal(kq, (B, Lq, D), dtype=jnp.float32)
    K = jax.random.normal(kk, (B, Lk, D), dtype=jnp.float32)
    V = jax.random.normal(kv_, (B, Lk, D), dtype=jnp.float32)
    scale = float(D) ** 0.5
    mask = (jax.random.uniform(km, (B, Lq, Lk)) > 0.2).astype(jnp.float32)

    atol = rtol = 3e-5

    # 1) scale + mask (exact path).
    out, attn = scaled_dot_product_attention(Q, K, V, scale=scale, mask=mask)
    out = jax.block_until_ready(out)
    attn = jax.block_until_ready(attn)
    ref_out, ref_attn = _reference(Q, K, V, scale=scale, mask=mask)
    assert jnp.allclose(out, ref_out, atol=atol, rtol=rtol)
    assert jnp.allclose(attn, ref_attn, atol=atol, rtol=rtol)

    # 2) no scale / no mask (no dummy mask materialized or DMA'd).
    out2, attn2 = scaled_dot_product_attention(Q, K, V)
    jax.block_until_ready(out2)
    ref_out2, ref_attn2 = _reference(Q, K, V)
    assert jnp.allclose(out2, ref_out2, atol=atol, rtol=rtol)
    assert jnp.allclose(attn2, ref_attn2, atol=atol, rtol=rtol)

    # 3) scale=0 is falsy -> no scaling (torch `if scale:` semantics).
    out3, attn3 = scaled_dot_product_attention(Q, K, V, scale=0.0)
    jax.block_until_ready(out3)
    assert jnp.allclose(out3, ref_out2, atol=atol, rtol=rtol)
    assert jnp.allclose(attn3, ref_attn2, atol=atol, rtol=rtol)

    # 4) output-only exact path (skips attn writeback, normalizes the output).
    out4, attn4 = scaled_dot_product_attention(Q, K, V, scale=scale, mask=mask,
                                               return_attention=False)
    jax.block_until_ready(out4)
    assert attn4 is None
    assert jnp.allclose(out4, ref_out, atol=atol, rtol=rtol)

    # 5) Lq tiling path (multiple q tiles per batch element).
    Lq2 = 16
    Q5 = jax.random.normal(kq, (B, Lq2, D), dtype=jnp.float32)
    out5, attn5 = scaled_dot_product_attention(Q5, K, V, scale=scale, q_block=8)
    jax.block_until_ready(out5)
    ref_out5, ref_attn5 = _reference(Q5, K, V, scale=scale)
    assert jnp.allclose(out5, ref_out5, atol=atol, rtol=rtol)
    assert jnp.allclose(attn5, ref_attn5, atol=atol, rtol=rtol)

    # 6) flash-style path, no mask, partial last K/V tile (Lk=40, tk=16).
    K6 = jax.random.normal(kk, (B, 40, D), dtype=jnp.float32)
    V6 = jax.random.normal(kv_, (B, 40, D), dtype=jnp.float32)
    out6, attn6 = scaled_dot_product_attention(Q5, K6, V6, scale=scale,
                                               return_attention=False, kv_block=16)
    jax.block_until_ready(out6)
    assert attn6 is None
    ref_out6, _ = _reference(Q5, K6, V6, scale=scale)
    assert jnp.allclose(out6, ref_out6, atol=atol, rtol=rtol)

    # 7) flash-style path with mask (tk forced to a lane-aligned 128), partial last tile.
    K7 = jax.random.normal(kk, (B, 160, D), dtype=jnp.float32)
    V7 = jax.random.normal(kv_, (B, 160, D), dtype=jnp.float32)
    mask7 = (jax.random.uniform(km, (B, Lq2, 160)) > 0.3).astype(jnp.float32)
    out7, _ = scaled_dot_product_attention(Q5, K7, V7, scale=scale, mask=mask7,
                                           return_attention=False, kv_block=128)
    jax.block_until_ready(out7)
    ref_out7, _ = _reference(Q5, K7, V7, scale=scale, mask=mask7)
    assert jnp.allclose(out7, ref_out7, atol=atol, rtol=rtol)

    # 8) opt-in bf16 MXU path (f32 accumulation) -- loose tolerance, smoke/compile check.
    out8, attn8 = scaled_dot_product_attention(Q, K, V, scale=scale, mask=mask,
                                               mxu_dtype=jnp.bfloat16)
    jax.block_until_ready(out8)
    assert jnp.allclose(out8, ref_out, atol=0.15, rtol=0.15)
    assert jnp.allclose(attn8, ref_attn, atol=0.15, rtol=0.15)

    # 9) opt-in bf16 attention-writeback dtype.
    out9, attn9 = scaled_dot_product_attention(Q, K, V, scale=scale, mask=mask,
                                               attn_dtype=jnp.bfloat16)
    jax.block_until_ready(out9)
    assert attn9.dtype == jnp.bfloat16
    assert jnp.allclose(out9, ref_out, atol=atol, rtol=rtol)
    assert jnp.allclose(attn9.astype(jnp.float32), ref_attn, atol=1e-2, rtol=1e-2)

    print("KERNEL_OK")
</pallas_src>

<mosaic_0001>
module attributes {stable_mosaic.version = 11 : i64} {
  func.func @_sdpa_exact_kernel(%arg0: i32, %arg1: i32, %arg2: memref<1x8x32xf32, #tpu.memory_space<vmem>>, %arg3: memref<1x8x32xf32, #tpu.memory_space<vmem>>, %arg4: memref<1x8x32xf32, #tpu.memory_space<vmem>>, %arg5: memref<1x8x8xf32, #tpu.memory_space<vmem>>, %arg6: memref<1x8x32xf32, #tpu.memory_space<vmem>>, %arg7: memref<1x8x8xf32, #tpu.memory_space<vmem>>) attributes {dimension_semantics = [#tpu.dimension_semantics<parallel>, #tpu.dimension_semantics<parallel>], iteration_bounds = array<i64: 2, 1>, scalar_prefetch = 0 : i64, scratch_operands = 0 : i64, tpu.core_type = #tpu.core_type<tc>, window_params = [{transform_indices = @transform_0, window_bounds = array<i64: 1, 8, 32>}, {transform_indices = @transform_1, window_bounds = array<i64: 1, 8, 32>}, {transform_indices = @transform_2, window_bounds = array<i64: 1, 8, 32>}, {transform_indices = @transform_3, window_bounds = array<i64: 1, 8, 8>}, {transform_indices = @transform_4, window_bounds = array<i64: 1, 8, 32>}, {transform_indices = @transform_5, window_bounds = array<i64: 1, 8, 8>}]} {
    %c0 = arith.constant 0 : index
    %c0_0 = arith.constant 0 : index
    %c0_1 = arith.constant 0 : index
    %0 = vector.load %arg2[%c0, %c0_0, %c0_1] : memref<1x8x32xf32, #tpu.memory_space<vmem>>, vector<1x8x32xf32>
    %1 = vector.shape_cast %0 : vector<1x8x32xf32> to vector<8x32xf32>
    %c0_2 = arith.constant 0 : index
    %c0_3 = arith.constant 0 : index
    %c0_4 = arith.constant 0 : index
    %2 = vector.load %arg3[%c0_2, %c0_3, %c0_4] : memref<1x8x32xf32, #tpu.memory_space<vmem>>, vector<1x8x32xf32>
    %3 = vector.shape_cast %2 : vector<1x8x32xf32> to vector<8x32xf32>
    %c0_5 = arith.constant 0 : index
    %c0_6 = arith.constant 0 : index
    %c0_7 = arith.constant 0 : index
    %4 = vector.load %arg4[%c0_5, %c0_6, %c0_7] : memref<1x8x32xf32, #tpu.memory_space<vmem>>, vector<1x8x32xf32>
    %5 = vector.shape_cast %4 : vector<1x8x32xf32> to vector<8x32xf32>
    %cst = arith.constant 0.176776692 : f32
    %6 = vector.broadcast %cst : f32 to vector<8x32xf32>
    %7 = arith.mulf %1, %6 : vector<8x32xf32>
    %cst_8 = arith.constant dense<0.000000e+00> : vector<8x8xf32>
    %8 = tpu.matmul %7, %3, %cst_8 {dimension_numbers = #tpu.dot_dimension_numbers<[1], [1], [0], [0], [0, 0, 1, 0], [], []>} : vector<8x32xf32>, vector<8x32xf32>, vector<8x8xf32> -> vector<8x8xf32>
    %c0_9 = arith.constant 0 : index
    %c0_10 = arith.constant 0 : index
    %c0_11 = arith.constant 0 : index
    %9 = vector.load %arg5[%c0_9, %c0_10, %c0_11] : memref<1x8x8xf32, #tpu.memory_space<vmem>>, vector<1x8x8xf32>
    %10 = vector.shape_cast %9 : vector<1x8x8xf32> to vector<8x8xf32>
    %cst_12 = arith.constant 0.000000e+00 : f32
    %11 = vector.broadcast %cst_12 : f32 to vector<8x8xf32>
    %12 = arith.cmpf oeq, %10, %11 : vector<8x8xf32>
    %cst_13 = arith.constant -1.000000e+09 : f32
    %13 = vector.broadcast %cst_13 : f32 to vector<8x8xf32>
    %14 = arith.select %12, %13, %8 : vector<8x8xi1>, vector<8x8xf32>
    %cst_14 = arith.constant dense<0xFF800000> : vector<8xf32>
    %15 = vector.multi_reduction <maximumf>, %14, %cst_14 [1] : vector<8x8xf32> to vector<8xf32>
    %16 = vector.shape_cast %15 : vector<8xf32> to vector<8x1xf32>
    %17 = vector.broadcast %16 : vector<8x1xf32> to vector<8x8xf32>
    %18 = arith.subf %14, %17 : vector<8x8xf32>
    %19 = math.exp %18 : vector<8x8xf32>
    %cst_15 = arith.constant dense<0.000000e+00> : vector<8xf32>
    %20 = vector.multi_reduction <add>, %19, %cst_15 [1] : vector<8x8xf32> to vector<8xf32>
    %21 = vector.shape_cast %20 : vector<8xf32> to vector<8x1xf32>
    %22 = tpu.reciprocal %21 {approx = true} : vector<8x1xf32> -> vector<8x1xf32>
    %23 = arith.mulf %21, %22 : vector<8x1xf32>
    %cst_16 = arith.constant 2.000000e+00 : f32
    %24 = vector.broadcast %cst_16 : f32 to vector<8x1xf32>
    %25 = arith.subf %24, %23 : vector<8x1xf32>
    %26 = arith.mulf %22, %25 : vector<8x1xf32>
    %27 = vector.broadcast %26 : vector<8x1xf32> to vector<8x8xf32>
    %28 = arith.mulf %19, %27 : vector<8x8xf32>
    %c0_17 = arith.constant 0 : index
    %c0_18 = arith.constant 0 : index
    %c0_19 = arith.constant 0 : index
    %29 = vector.load %arg7[%c0_17, %c0_18, %c0_19] : memref<1x8x8xf32, #tpu.memory_space<vmem>>, vector<1x8x8xf32>
    %30 = vector.shape_cast %29 : vector<1x8x8xf32> to vector<8x8xf32>
    %31 = vector.shape_cast %28 : vector<8x8xf32> to vector<1x8x8xf32>
    tpu.vector_store %arg7[%c0_17, %c0_18, %c0_19], %31 {strides = array<i32>} : memref<1x8x8xf32, #tpu.memory_space<vmem>>, vector<1x8x8xf32>,
    %cst_20 = arith.constant dense<0.000000e+00> : vector<8x32xf32>
    %32 = tpu.matmul %28, %5, %cst_20 {dimension_numbers = #tpu.dot_dimension_numbers<[1], [0], [0], [1], [0, 0, 1, 1], [], []>} : vector<8x8xf32>, vector<8x32xf32>, vector<8x32xf32> -> vector<8x32xf32>
    %c0_21 = arith.constant 0 : index
    %c0_22 = arith.constant 0 : index
    %c0_23 = arith.constant 0 : index
    %33 = vector.load %arg6[%c0_21, %c0_22, %c0_23] : memref<1x8x32xf32, #tpu.memory_space<vmem>>, vector<1x8x32xf32>
    %34 = vector.shape_cast %33 : vector<1x8x32xf32> to vector<8x32xf32>
    %35 = vector.shape_cast %32 : vector<8x32xf32> to vector<1x8x32xf32>
    tpu.vector_store %arg6[%c0_21, %c0_22, %c0_23], %35 {strides = array<i32>} : memref<1x8x32xf32, #tpu.memory_space<vmem>>, vector<1x8x32xf32>,
    return
  }
  func.func @transform_0(%arg0: i32, %arg1: i32) -> (i32, i32, i32) {
    %c0_i32 = arith.constant 0 : i32
    %c0_i32_0 = arith.constant 0 : i32
    return %arg0, %arg1, %c0_i32 : i32, i32, i32
  }
  func.func @transform_1(%arg0: i32, %arg1: i32) -> (i32, i32, i32) {
    %c0_i32 = arith.constant 0 : i32
    %c0_i32_0 = arith.constant 0 : i32
    %c0_i32_1 = arith.constant 0 : i32
    return %arg0, %c0_i32, %c0_i32_0 : i32, i32, i32
  }
  func.func @transform_2(%arg0: i32, %arg1: i32) -> (i32, i32, i32) {
    %c0_i32 = arith.constant 0 : i32
    %c0_i32_0 = arith.constant 0 : i32
    %c0_i32_1 = arith.constant 0 : i32
    return %arg0, %c0_i32, %c0_i32_0 : i32, i32, i32
  }
  func.func @transform_3(%arg0: i32, %arg1: i32) -> (i32, i32, i32) {
    %c0_i32 = arith.constant 0 : i32
    %c0_i32_0 = arith.constant 0 : i32
    return %arg0, %arg1, %c0_i32 : i32, i32, i32
  }
  func.func @transform_4(%arg0: i32, %arg1: i32) -> (i32, i32, i32) {
    %c0_i32 = arith.constant 0 : i32
    %c0_i32_0 = arith.constant 0 : i32
    return %arg0, %arg1, %c0_i32 : i32, i32, i32
  }
  func.func @transform_5(%arg0: i32, %arg1: i32) -> (i32, i32, i32) {
    %c0_i32 = arith.constant 0 : i32
    %c0_i32_0 = arith.constant 0 : i32
    return %arg0, %arg1, %c0_i32 : i32, i32, i32
  }
}

</mosaic_0001>

<llo_original>
// kernel: tpu_custom_call.1
$region0: #{tpu_custom_call.1}
  #allocation0 [shape = 'u32[]', space=smem, size = 0x4, offset = 0x4, fixed_abs, tag = 'smem constant byte address 0x4 - core index']
  #allocation1 [shape = 'u32[144,128]{1,0:T(1,128)}', space=vmem, size = 0x12000, scoped, tag = 'internal scratch']
  %s0 = inlined_call_operand.hbm [shape: f32[2,8,32], index: 0, kind: input, shape index: {}]
  %s1 = inlined_call_operand.hbm [shape: f32[2,8,32], index: 1, kind: input, shape index: {}]
  %s2 = inlined_call_operand.hbm [shape: f32[2,8,32], index: 2, kind: input, shape index: {}]
  %s3 = inlined_call_operand.hbm [shape: f32[2,8,8], index: 3, kind: input, shape index: {}]
  %s4 = inlined_call_operand.hbm [shape: f32[2,8,32], index: 4, kind: output, shape index: {0}]
  %s5 = inlined_call_operand.hbm [shape: f32[2,8,8], index: 5, kind: output, shape index: {1}]
  %6 = xla_tuple %s4, %s5
  %s7 = sld [smem:[#allocation0]]
  $region73: #{tpu_custom_call.1} parent=0
    _
  %s9 = ssub.s32 1, %s7
  %s10 = scalar_select 0, %s9, %s7
  $region1: #{tpu_custom_call.1} parent=0
    #allocation2 [shape = 'u8[8192]{0}', space=vmem, size = 0x2000, scoped, tag = 'input window, operand 0']
    #allocation3 [shape = 's32[2]{0}', space=sflag, size = 0x8, scoped, tag = 'scoped memory for tpu_custom_call.1']
    #allocation4 [shape = 's32[2]{0}', space=sflag, size = 0x8, scoped, tag = 'scoped memory for tpu_custom_call.1']
    #allocation5 [shape = 'u8[8192]{0}', space=vmem, size = 0x2000, scoped, tag = 'input window, operand 1']
    #allocation6 [shape = 's32[2]{0}', space=sflag, size = 0x8, scoped, tag = 'scoped memory for tpu_custom_call.1']
    #allocation7 [shape = 'u8[8192]{0}', space=vmem, size = 0x2000, scoped, tag = 'input window, operand 2']
    #allocation8 [shape = 'u8[8192]{0}', space=vmem, size = 0x2000, scoped, tag = 'input window, operand 3']
    #allocation9 [shape = 's32[2]{0}', space=sflag, size = 0x8, scoped, tag = 'scoped memory for tpu_custom_call.1']
    #allocation10 [shape = 'u8[8192]{0}', space=vmem, size = 0x2000, scoped, tag = 'output window, operand 0']
    #allocation11 [shape = 'u8[8192]{0}', space=vmem, size = 0x2000, scoped, tag = 'output window, operand 1']
    #allocation12 [shape = 's32[2]{0}', space=sflag, size = 0x8, scoped, tag = 'scoped memory for tpu_custom_call.1']
    %11 = vsyncpa [#allocation3], 0
    %s12 = scalar_lea.sflag [#allocation3], 1
    %13 = vsyncpa %s12, 0
    %14 = vsyncpa [#allocation6], 0
    %s15 = scalar_lea.sflag [#allocation6], 1
    %16 = vsyncpa %s15, 0
    %17 = vsyncpa [#allocation9], 0
    %s18 = scalar_lea.sflag [#allocation9], 1
    %19 = vsyncpa %s18, 0
    %20 = vsyncpa [#allocation4], 0
    %s21 = scalar_lea.sflag [#allocation4], 1
    %22 = vsyncpa %s21, 0
    %23 = vsyncpa [#allocation12], 0
    %s24 = scalar_lea.sflag [#allocation12], 1
    %25 = vsyncpa %s24, 0
    loop: start=0, step=1, limit=4
    $region2: #{tpu_custom_call.1} parent=1 // loop_pre_header
      _
    $region3: #{tpu_custom_call.1} parent=1 // loop_header
      %s27 = sphi 0, %s31
      %p28 = scmp.ge.s32.totalorder %s27, 4
      %s34 = sphi 0, %s46
      %s35 = sphi 0, %s42
      %s36 = sphi 0, %s34
      %s37 = sphi 0, %s35
      %s38 = sphi 0, %s36
      %s39 = sphi 0, %s37
      %s51 = sphi 0, %s53
      %s54 = sphi 0, %s51
      %s55 = sphi 0, %s54
      %s71 = sphi 0, %s55
      %s77 = sphi 0, %s79
      %s80 = sphi 0, %s77
      %s81 = sphi 0, %s80
      %s97 = sphi 0, %s81
      %s103 = sphi 0, %s105
      %s106 = sphi 0, %s103
      %s107 = sphi 0, %s106
      %s123 = sphi 0, %s107
      %s131 = sphi 0, %s133
      %s134 = sphi 0, %s131
      %s135 = sphi 0, %s134
      %s151 = sphi 0, %s135
      %s159 = sphi 0, %s161
      %s162 = sphi 0, %s159
      %s163 = sphi 0, %s162
      %s179 = sphi 0, %s163
      %s187 = sphi 0, %s189
      %s190 = sphi 0, %s187
      %s191 = sphi 0, %s190
      %s207 = sphi 0, %s191
    $region4: #{tpu_custom_call.1} parent=1 // loop_header_branch
      %30 = sbr.rel (%p28) target = $region8
    $region5: #{tpu_custom_call.1} parent=1 // loop_body
      %s32 = ssub.s32 %s27, 1
      %s33 = ssub.s32 %s27, 2
      %s40 = sadd.s32 1, %s35
      %p41 = scmp.ge.s32.totalorder %s40, 1
      %s42 = scalar_select %p41, 0, %s40
      %s43 = sadd.s32 1, %s34
      %s44 = scalar_select %p41, %s43, %s34
      %p45 = scmp.ge.s32.totalorder %s44, 2
      %s46 = scalar_select %p45, 0, %s44
      %s47 = ssub.s32 %s34, %s46
      %s48 = ssub.s32 %s35, %s42
      %s49 = sor.u32 %s47, %s48
      %p50 = scmp.eq.s32.totalorder %s49, 0
      %s52 = sadd.s32 %s51, 1
      %s53 = scalar_select %p50, %s51, %s52
      %p56 = pneg %p50
      %p57 = scmp.eq.s32.totalorder %s27, 1
      %p58 = por %p56, %p57
      %p59 = scmp.ne.s32.totalorder %s51, %s54
      %p60 = scmp.eq.s32.totalorder %s27, 0
      %p61 = por %p59, %p60
      %p62 = scmp.ne.s32.totalorder %s51, %s54
      %p63 = scmp.eq.s32.totalorder %s32, 1
      %p64 = por %p62, %p63
      %p65 = scmp.ne.s32.totalorder %s54, %s55
      %p66 = scmp.eq.s32.totalorder %s32, 0
      %p67 = por %p65, %p66
      %p68 = scmp.ne.s32.totalorder %s54, %s55
      %p69 = scmp.eq.s32.totalorder %s33, 1
      %p70 = por %p68, %p69
      %p72 = scmp.ne.s32.totalorder %s55, %s71
      %p73 = scmp.eq.s32.totalorder %s33, 0
      %p74 = por %p72, %p73
      %s75 = ssub.s32 %s34, %s46
      %p76 = scmp.eq.s32.totalorder %s75, 0
      %s78 = sadd.s32 %s77, 1
      %s79 = scalar_select %p76, %s77, %s78
      %p82 = pneg %p76
      %p83 = scmp.eq.s32.totalorder %s27, 1
      %p84 = por %p82, %p83
      %p85 = scmp.ne.s32.totalorder %s77, %s80
      %p86 = scmp.eq.s32.totalorder %s27, 0
      %p87 = por %p85, %p86
      %p88 = scmp.ne.s32.totalorder %s77, %s80
      %p89 = scmp.eq.s32.totalorder %s32, 1
      %p90 = por %p88, %p89
      %p91 = scmp.ne.s32.totalorder %s80, %s81
      %p92 = scmp.eq.s32.totalorder %s32, 0
      %p93 = por %p91, %p92
      %p94 = scmp.ne.s32.totalorder %s80, %s81
      %p95 = scmp.eq.s32.totalorder %s33, 1
      %p96 = por %p94, %p95
      %p98 = scmp.ne.s32.totalorder %s81, %s97
      %p99 = scmp.eq.s32.totalorder %s33, 0
      %p100 = por %p98, %p99
      %s101 = ssub.s32 %s34, %s46
      %p102 = scmp.eq.s32.totalorder %s101, 0
      %s104 = sadd.s32 %s103, 1
      %s105 = scalar_select %p102, %s103, %s104
      %p108 = pneg %p102
      %p109 = scmp.eq.s32.totalorder %s27, 1
      %p110 = por %p108, %p109
      %p111 = scmp.ne.s32.totalorder %s103, %s106
      %p112 = scmp.eq.s32.totalorder %s27, 0
      %p113 = por %p111, %p112
      %p114 = scmp.ne.s32.totalorder %s103, %s106
      %p115 = scmp.eq.s32.totalorder %s32, 1
      %p116 = por %p114, %p115
      %p117 = scmp.ne.s32.totalorder %s106, %s107
      %p118 = scmp.eq.s32.totalorder %s32, 0
      %p119 = por %p117, %p118
      %p120 = scmp.ne.s32.totalorder %s106, %s107
      %p121 = scmp.eq.s32.totalorder %s33, 1
      %p122 = por %p120, %p121
      %p124 = scmp.ne.s32.totalorder %s107, %s123
      %p125 = scmp.eq.s32.totalorder %s33, 0
      %p126 = por %p124, %p125
      %s127 = ssub.s32 %s34, %s46
      %s128 = ssub.s32 %s35, %s42
      %s129 = sor.u32 %s127, %s128
      %p130 = scmp.eq.s32.totalorder %s129, 0
      %s132 = sadd.s32 %s131, 1
      %s133 = scalar_select %p130, %s131, %s132
      %p136 = pneg %p130
      %p137 = scmp.eq.s32.totalorder %s27, 1
      %p138 = por %p136, %p137
      %p139 = scmp.ne.s32.totalorder %s131, %s134
      %p140 = scmp.eq.s32.totalorder %s27, 0
      %p141 = por %p139, %p140
      %p142 = scmp.ne.s32.totalorder %s131, %s134
      %p143 = scmp.eq.s32.totalorder %s32, 1
      %p144 = por %p142, %p143
      %p145 = scmp.ne.s32.totalorder %s134, %s135
      %p146 = scmp.eq.s32.totalorder %s32, 0
      %p147 = por %p145, %p146
      %p148 = scmp.ne.s32.totalorder %s134, %s135
      %p149 = scmp.eq.s32.totalorder %s33, 1
      %p150 = por %p148, %p149
      %p152 = scmp.ne.s32.totalorder %s135, %s151
      %p153 = scmp.eq.s32.totalorder %s33, 0
      %p154 = por %p152, %p153
      %s155 = ssub.s32 %s34, %s46
      %s156 = ssub.s32 %s35, %s42
      %s157 = sor.u32 %s155, %s156
      %p158 = scmp.eq.s32.totalorder %s157, 0
      %s160 = sadd.s32 %s159, 1
      %s161 = scalar_select %p158, %s159, %s160
      %p164 = pneg %p158
      %p165 = scmp.eq.s32.totalorder %s27, 1
      %p166 = por %p164, %p165
      %p167 = scmp.ne.s32.totalorder %s159, %s162
      %p168 = scmp.eq.s32.totalorder %s27, 0
      %p169 = por %p167, %p168
      %p170 = scmp.ne.s32.totalorder %s159, %s162
      %p171 = scmp.eq.s32.totalorder %s32, 1
      %p172 = por %p170, %p171
      %p173 = scmp.ne.s32.totalorder %s162, %s163
      %p174 = scmp.eq.s32.totalorder %s32, 0
      %p175 = por %p173, %p174
      %p176 = scmp.ne.s32.totalorder %s162, %s163
      %p177 = scmp.eq.s32.totalorder %s33, 1
      %p178 = por %p176, %p177
      %p180 = scmp.ne.s32.totalorder %s163, %s179
      %p181 = scmp.eq.s32.totalorder %s33, 0
      %p182 = por %p180, %p181
      %s183 = ssub.s32 %s34, %s46
      %s184 = ssub.s32 %s35, %s42
      %s185 = sor.u32 %s183, %s184
      %p186 = scmp.eq.s32.totalorder %s185, 0
      %s188 = sadd.s32 %s187, 1
      %s189 = scalar_select %p186, %s187, %s188
      %p192 = pneg %p186
      %p193 = scmp.eq.s32.totalorder %s27, 1
      %p194 = por %p192, %p193
      %p195 = scmp.ne.s32.totalorder %s187, %s190
      %p196 = scmp.eq.s32.totalorder %s27, 0
      %p197 = por %p195, %p196
      %p198 = scmp.ne.s32.totalorder %s187, %s190
      %p199 = scmp.eq.s32.totalorder %s32, 1
      %p200 = por %p198, %p199
      %p201 = scmp.ne.s32.totalorder %s190, %s191
      %p202 = scmp.eq.s32.totalorder %s32, 0
      %p203 = por %p201, %p202
      %p204 = scmp.ne.s32.totalorder %s190, %s191
      %p205 = scmp.eq.s32.totalorder %s33, 1
      %p206 = por %p204, %p205
      %p208 = scmp.ne.s32.totalorder %s191, %s207
      %p209 = scmp.eq.s32.totalorder %s33, 0
      %p210 = por %p208, %p209
      %p211 = scmp.le.s32.totalorder 1, %s27
      %p212 = scmp.lt.s32.totalorder %s27, 3
      %p213 = pnand %p211, %p212
      %p214 = pneg %p213
      // Predicated region
      $region9: #{tpu_custom_call.1} parent=5 // pred_check
        _
      $region10: #{tpu_custom_call.1} parent=5 // pred_check_branch
        %216 = sbr.rel (%p213) target = $region12
      $region11: #{tpu_custom_call.1} parent=5 // pred_region
        %s217 = ssub.s32 %s27, 1
      $region12: #{tpu_custom_call.1} parent=5 // pred_fallthru
        _
      %p218 = scmp.lt.s32.totalorder %s27, 2
      // Predicated region
      $region13: #{tpu_custom_call.1} parent=5 // pred_check
        %p219 = pneg %p218
      $region14: #{tpu_custom_call.1} parent=5 // pred_check_branch
        %221 = sbr.rel (%p219) target = $region16
      $region15: #{tpu_custom_call.1} parent=5 // pred_region
        // Predicated region
        $region17: #{tpu_custom_call.1} parent=15 // pred_check
          %p222 = pneg %p61
        $region18: #{tpu_custom_call.1} parent=15 // pred_check_branch
          %224 = sbr.rel (%p222) target = $region20
        $region19: #{tpu_custom_call.1} parent=15 // pred_region
          %s225 = sand.u32 %s51, 1
          %s226 = scalar_lea.sflag [#allocation3], %s225
          %s227 = sand.u32 %s51, 1
          %s228 = smul.addr %s227, 8
          %s229 = scalar_lea.vmem [#allocation2], %s228
          %s231 = ssub.s32 128, 128
          %232 = vsyncadd %s226, %s231
          %s233 = sadd.s32 %s35, %s34
          %s234 = smul.addr %s233, 128
          %s235 = scalar_lea.hbm %s0, %s234
          %s237 = sshll.u32 %s229, 4
          %s238 = int_to_ptr.vmem [resolvable:$true] %s237
          %240 = dma.hbm_to_vmem [thread:$0]  %s235, 128, %s238, %s226
        $region20: #{tpu_custom_call.1} parent=15 // pred_fallthru
          _
        // Predicated region
        $region21: #{tpu_custom_call.1} parent=15 // pred_check
          %p241 = pneg %p87
        $region22: #{tpu_custom_call.1} parent=15 // pred_check_branch
          %243 = sbr.rel (%p241) target = $region24
        $region23: #{tpu_custom_call.1} parent=15 // pred_region
          %s244 = sand.u32 %s27, 1
          %s245 = scalar_lea.sflag [#allocation6], %s244
          %s246 = sand.u32 %s77, 1
          %s247 = smul.addr %s246, 8
          %s248 = scalar_lea.vmem [#allocation5], %s247
          %s250 = ssub.s32 128, 128
          %251 = vsyncadd %s245, %s250
          %s252 = smul.addr %s34, 128
          %s253 = scalar_lea.hbm %s1, %s252
          %s255 = sshll.u32 %s248, 4
          %s256 = int_to_ptr.vmem [resolvable:$true] %s255
          %258 = dma.hbm_to_vmem [thread:$0]  %s253, 128, %s256, %s245
        $region24: #{tpu_custom_call.1} parent=15 // pred_fallthru
          _
        // Predicated region
        $region25: #{tpu_custom_call.1} parent=15 // pred_check
          %p259 = pneg %p113
        $region26: #{tpu_custom_call.1} parent=15 // pred_check_branch
          %261 = sbr.rel (%p259) target = $region28
        $region27: #{tpu_custom_call.1} parent=15 // pred_region
          %s262 = sand.u32 %s27, 1
          %s263 = scalar_lea.sflag [#allocation6], %s262
          %s264 = sand.u32 %s103, 1
          %s265 = smul.addr %s264, 8
          %s266 = scalar_lea.vmem [#allocation7], %s265
          %s268 = ssub.s32 128, 128
          %269 = vsyncadd %s263, %s268
          %s270 = smul.addr %s34, 128
          %s271 = scalar_lea.hbm %s2, %s270
          %s273 = sshll.u32 %s266, 4
          %s274 = int_to_ptr.vmem [resolvable:$true] %s273
          %276 = dma.hbm_to_vmem [thread:$0]  %s271, 128, %s274, %s263
        $region28: #{tpu_custom_call.1} parent=15 // pred_fallthru
          _
        // Predicated region
        $region29: #{tpu_custom_call.1} parent=15 // pred_check
          %p277 = pneg %p141
        $region30: #{tpu_custom_call.1} parent=15 // pred_check_branch
          %279 = sbr.rel (%p277) target = $region32
        $region31: #{tpu_custom_call.1} parent=15 // pred_region
          %s280 = sand.u32 %s131, 1
          %s281 = scalar_lea.sflag [#allocation9], %s280
          %s282 = sand.u32 %s131, 1
          %s283 = smul.addr %s282, 8
          %s284 = scalar_lea.vmem [#allocation8], %s283
          %s286 = ssub.s32 128, 128
          %287 = vsyncadd %s281, %s286
          %s288 = sadd.s32 %s35, %s34
          %s289 = smul.addr %s288, 128
          %s290 = scalar_lea.hbm %s3, %s289
          %s292 = sshll.u32 %s284, 4
          %s293 = int_to_ptr.vmem [resolvable:$true] %s292
          %295 = dma.hbm_to_vmem [thread:$0]  %s290, 128, %s293, %s281
        $region32: #{tpu_custom_call.1} parent=15 // pred_fallthru
          _
      $region16: #{tpu_custom_call.1} parent=5 // pred_fallthru
        _
      %p296 = scmp.le.s32.totalorder 1, %s27
      %p297 = scmp.lt.s32.totalorder %s27, 3
      %p298 = pnand %p296, %p297
      %p299 = pneg %p298
      // Predicated region
      $region33: #{tpu_custom_call.1} parent=5 // pred_check
        _
      $region34: #{tpu_custom_call.1} parent=5 // pred_check_branch
        %301 = sbr.rel (%p298) target = $region36
      $region35: #{tpu_custom_call.1} parent=5 // pred_region
        %s302 = ssub.s32 %s27, 1
        %s303 = sand.u32 %s54, 1
        %s304 = scalar_lea.sflag [#allocation3], %s303
        %s305 = sand.u32 %s54, 1
        %s306 = smul.addr %s305, 8
        %s307 = scalar_lea.vmem [#allocation2], %s306
        // Predicated region
        $region37: #{tpu_custom_call.1} parent=35 // pred_check
          %p308 = pneg %p67
        $region38: #{tpu_custom_call.1} parent=35 // pred_check_branch
          %310 = sbr.rel (%p308) target = $region40
        $region39: #{tpu_custom_call.1} parent=35 // pred_region
          %311 = dma.done %s304, 128
        $region40: #{tpu_custom_call.1} parent=35 // pred_fallthru
          _
        %s312 = sand.u32 %s32, 1
        %s313 = scalar_lea.sflag [#allocation6], %s312
        %s314 = sand.u32 %s80, 1
        %s315 = smul.addr %s314, 8
        %s316 = scalar_lea.vmem [#allocation5], %s315
        // Predicated region
        $region41: #{tpu_custom_call.1} parent=35 // pred_check
          %p317 = pneg %p93
        $region42: #{tpu_custom_call.1} parent=35 // pred_check_branch
          %319 = sbr.rel (%p317) target = $region44
        $region43: #{tpu_custom_call.1} parent=35 // pred_region
          %320 = dma.done %s313, 128
        $region44: #{tpu_custom_call.1} parent=35 // pred_fallthru
          _
        %s321 = sand.u32 %s32, 1
        %s322 = scalar_lea.sflag [#allocation6], %s321
        %s323 = sand.u32 %s106, 1
        %s324 = smul.addr %s323, 8
        %s325 = scalar_lea.vmem [#allocation7], %s324
        // Predicated region
        $region45: #{tpu_custom_call.1} parent=35 // pred_check
          %p326 = pneg %p119
        $region46: #{tpu_custom_call.1} parent=35 // pred_check_branch
          %328 = sbr.rel (%p326) target = $region48
        $region47: #{tpu_custom_call.1} parent=35 // pred_region
          %329 = dma.done %s322, 128
        $region48: #{tpu_custom_call.1} parent=35 // pred_fallthru
          _
        %s330 = sand.u32 %s134, 1
        %s331 = scalar_lea.sflag [#allocation9], %s330
        %s332 = sand.u32 %s134, 1
        %s333 = smul.addr %s332, 8
        %s334 = scalar_lea.vmem [#allocation8], %s333
        // Predicated region
        $region49: #{tpu_custom_call.1} parent=35 // pred_check
          %p335 = pneg %p147
        $region50: #{tpu_custom_call.1} parent=35 // pred_check_branch
          %337 = sbr.rel (%p335) target = $region52
        $region51: #{tpu_custom_call.1} parent=35 // pred_region
          %338 = dma.done %s331, 128
        $region52: #{tpu_custom_call.1} parent=35 // pred_fallthru
          _
        %s339 = sand.u32 %s54, 1
        %s340 = scalar_lea.sflag [#allocation3], %s339
        %s341 = sand.u32 %s54, 1
        %s342 = smul.addr %s341, 8
        %s343 = scalar_lea.vmem [#allocation2], %s342
        %p344 = pneg %p67
        %p345 = pneg %p64
        %s346 = sand.u32 %s32, 1
        %s347 = scalar_lea.sflag [#allocation6], %s346
        %s348 = sand.u32 %s80, 1
        %s349 = smul.addr %s348, 8
        %s350 = scalar_lea.vmem [#allocation5], %s349
        %p351 = pneg %p93
        %p352 = pneg %p90
        %s353 = sand.u32 %s32, 1
        %s354 = scalar_lea.sflag [#allocation6], %s353
        %s355 = sand.u32 %s106, 1
        %s356 = smul.addr %s355, 8
        %s357 = scalar_lea.vmem [#allocation7], %s356
        %p358 = pneg %p119
        %p359 = pneg %p116
        %s360 = sand.u32 %s134, 1
        %s361 = scalar_lea.sflag [#allocation9], %s360
        %s362 = sand.u32 %s134, 1
        %s363 = smul.addr %s362, 8
        %s364 = scalar_lea.vmem [#allocation8], %s363
        %p365 = pneg %p147
        %p366 = pneg %p144
        %p367 = pneg %p175
        %p368 = pneg %p172
        %s369 = sand.u32 %s162, 1
        %s370 = scalar_lea.sflag [#allocation4], %s369
        %s371 = sand.u32 %s162, 1
        %s372 = smul.addr %s371, 8
        %s373 = scalar_lea.vmem [#allocation10], %s372
        %p374 = pneg %p203
        %p375 = pneg %p200
        %s376 = sand.u32 %s190, 1
        %s377 = scalar_lea.sflag [#allocation12], %s376
        %s378 = sand.u32 %s190, 1
        %s379 = smul.addr %s378, 8
        %s380 = scalar_lea.vmem [#allocation11], %s379
        %v381 = vld [vmem:[%s307] sm:$0xff]
        %v382 = vld [vmem:[%s316] sm:$0xff]
        %v383 = vld [vmem:[%s325] sm:$0xff]
        %v384 = vmul.f32 %v381, 0.17677669
        %vm385 = vcmask 261120
        %v387 = vsel %vm385, %v384, 0
        %v390 = vsel %vm385, %v382, 0
        %392 = vmatprep.subr.mxu0 0.0
        %393 = vmatpush1.xpose.msra.mxu0 %v390
        %394 = vmatprep.subr.mxu0 0.0
        %395 = vmatpush1.xpose.msra.mxu0 0.0
        %396 = vmatprep.subr.mxu0 0.0
        %397 = vmatpush1.xpose.msra.mxu0 0.0
        %398 = vmatprep.subr.mxu0 0.0
        %399 = vmatpush1.xpose.msra.mxu0 0.0
        %400 = vmatprep.subr.mxu0 0.0
        %401 = vmatpush1.xpose.msra.mxu0 0.0
        %402 = vmatprep.subr.mxu0 0.0
        %403 = vmatpush1.xpose.msra.mxu0 0.0
        %404 = vmatprep.subr.mxu0 0.0
        %405 = vmatpush1.xpose.msra.mxu0 0.0
        %406 = vmatprep.subr.mxu0 0.0
        %407 = vmatpush1.xpose.msra.mxu0 0.0
        %408 = vmatprep.subr.mxu0 0.0
        %409 = vmatpush1.xpose.msra.mxu0 0.0
        %410 = vmatprep.subr.mxu0 0.0
        %411 = vmatpush1.xpose.msra.mxu0 0.0
        %412 = vmatprep.subr.mxu0 0.0
        %413 = vmatpush1.xpose.msra.mxu0 0.0
        %414 = vmatprep.subr.mxu0 0.0
        %415 = vmatpush1.xpose.msra.mxu0 0.0
        %416 = vmatprep.subr.mxu0 0.0
        %417 = vmatpush1.xpose.msra.mxu0 0.0
        %418 = vmatprep.subr.mxu0 0.0
        %419 = vmatpush1.xpose.msra.mxu0 0.0
        %420 = vmatprep.subr.mxu0 0.0
        %421 = vmatpush1.xpose.msra.mxu0 0.0
        %422 = vmatprep.subr.mxu0 0.0
        %423 = vmatpush1.xpose.msra.mxu0 0.0
        %424 = vmatprep.subr.mxu0 0.0
        %425 = vmatpush1.xpose.msra.mxu0 0.0
        %426 = vmatprep.subr.mxu0 0.0
        %427 = vmatpush1.xpose.msra.mxu0 0.0
        %428 = vmatprep.subr.mxu0 0.0
        %429 = vmatpush1.xpose.msra.mxu0 0.0
        %430 = vmatprep.subr.mxu0 0.0
        %431 = vmatpush1.xpose.msra.mxu0 0.0
        %432 = vmatprep.subr.mxu0 0.0
        %433 = vmatpush1.xpose.msra.mxu0 0.0
        %434 = vmatprep.subr.mxu0 0.0
        %435 = vmatpush1.xpose.msra.mxu0 0.0
        %436 = vmatprep.subr.mxu0 0.0
        %437 = vmatpush1.xpose.msra.mxu0 0.0
        %438 = vmatprep.subr.mxu0 0.0
        %439 = vmatpush1.xpose.msra.mxu0 0.0
        %440 = vmatprep.subr.mxu0 0.0
        %441 = vmatpush1.xpose.msra.mxu0 0.0
        %442 = vmatprep.subr.mxu0 0.0
        %443 = vmatpush1.xpose.msra.mxu0 0.0
        %444 = vmatprep.subr.mxu0 0.0
        %445 = vmatpush1.xpose.msra.mxu0 0.0
        %446 = vmatprep.subr.mxu0 0.0
        %447 = vmatpush1.xpose.msra.mxu0 0.0
        %448 = vmatprep.subr.mxu0 0.0
        %449 = vmatpush1.xpose.msra.mxu0 0.0
        %450 = vmatprep.subr.mxu0 0.0
        %451 = vmatpush1.xpose.msra.mxu0 0.0
        %452 = vmatprep.subr.mxu0 0.0
        %453 = vmatpush1.xpose.msra.mxu0 0.0
        %454 = vmatprep.subr.mxu0 0.0
        %455 = vmatpush1.xpose.msra.mxu0 0.0
        %456 = vmatprep.mubr.f32.mxu0 0.0
        %457 = vmatmul.mubr.f32.gmra.mrb[0].mxu0 %v387
        %v458 = vpop.f32.mrb[0].mxu0
        %v459 = vadd.f32 0.0, %v458
        %v460 = vpop.f32.mrb[0].mxu0
        %461 = vdwg.mxu0
        %v462 = vld [vmem:[%s334] sm:$0xff]
        %vm463 = vcmp.eq.f32.partialorder %v462, 0.0
        %v464 = vsel %vm463, -1e+09, %v459
        %vm465 = vcmask 64512
        %v466 = vsel %vm465, %v464, -inf
        %467 = vmax.xlane.f32.xlu0 %v466
        %v468 = vpop.xlane.xlu0 %467
        %v469 = vsub.f32 %v464, %v468
        %v470 = vmul.f32 %v469, 1.442695
        %v471 = vpow.pop %v470
        %v472 = vsel %vm465, %v471, 0.0
        %473 = vadd.xlane.f32.xlu0 %v472
        %v474 = vpop.xlane.xlu0 %473
        %v475 = vrcp.pop %v474
        %v476 = vmul.f32 %v474, %v475
        %v477 = vsub.f32 2.0, %v476
        %v478 = vmul.f32 %v475, %v477
        %v479 = vmul.f32 %v471, %v478
        %480 = vst.msk [vmem:[%s380] sm:$0xff] %vm465, %v479
        %v482 = vsel %vm465, %v479, 0
        %484 = vmatprep.subr.mxu0 0.0
        %485 = vmatpush1.msra.mxu0 %v383
        %486 = vmatprep.subr.mxu0 0.0
        %487 = vmatpush1.msra.mxu0 0.0
        %488 = vmatprep.subr.mxu0 0.0
        %489 = vmatpush1.msra.mxu0 0.0
        %490 = vmatprep.subr.mxu0 0.0
        %491 = vmatpush1.msra.mxu0 0.0
        %492 = vmatprep.subr.mxu0 0.0
        %493 = vmatpush1.msra.mxu0 0.0
        %494 = vmatprep.subr.mxu0 0.0
        %495 = vmatpush1.msra.mxu0 0.0
        %496 = vmatprep.subr.mxu0 0.0
        %497 = vmatpush1.msra.mxu0 0.0
        %498 = vmatprep.subr.mxu0 0.0
        %499 = vmatpush1.msra.mxu0 0.0
        %500 = vmatprep.subr.mxu0 0.0
        %501 = vmatpush1.msra.mxu0 0.0
        %502 = vmatprep.subr.mxu0 0.0
        %503 = vmatpush1.msra.mxu0 0.0
        %504 = vmatprep.subr.mxu0 0.0
        %505 = vmatpush1.msra.mxu0 0.0
        %506 = vmatprep.subr.mxu0 0.0
        %507 = vmatpush1.msra.mxu0 0.0
        %508 = vmatprep.subr.mxu0 0.0
        %509 = vmatpush1.msra.mxu0 0.0
        %510 = vmatprep.subr.mxu0 0.0
        %511 = vmatpush1.msra.mxu0 0.0
        %512 = vmatprep.subr.mxu0 0.0
        %513 = vmatpush1.msra.mxu0 0.0
        %514 = vmatprep.subr.mxu0 0.0
        %515 = vmatpush1.msra.mxu0 0.0
        %516 = vmatprep.subr.mxu0 0.0
        %517 = vmatpush1.msra.mxu0 0.0
        %518 = vmatprep.subr.mxu0 0.0
        %519 = vmatpush1.msra.mxu0 0.0
        %520 = vmatprep.subr.mxu0 0.0
        %521 = vmatpush1.msra.mxu0 0.0
        %522 = vmatprep.subr.mxu0 0.0
        %523 = vmatpush1.msra.mxu0 0.0
        %524 = vmatprep.subr.mxu0 0.0
        %525 = vmatpush1.msra.mxu0 0.0
        %526 = vmatprep.subr.mxu0 0.0
        %527 = vmatpush1.msra.mxu0 0.0
        %528 = vmatprep.subr.mxu0 0.0
        %529 = vmatpush1.msra.mxu0 0.0
        %530 = vmatprep.subr.mxu0 0.0
        %531 = vmatpush1.msra.mxu0 0.0
        %532 = vmatprep.subr.mxu0 0.0
        %533 = vmatpush1.msra.mxu0 0.0
        %534 = vmatprep.subr.mxu0 0.0
        %535 = vmatpush1.msra.mxu0 0.0
        %536 = vmatprep.subr.mxu0 0.0
        %537 = vmatpush1.msra.mxu0 0.0
        %538 = vmatprep.subr.mxu0 0.0
        %539 = vmatpush1.msra.mxu0 0.0
        %540 = vmatprep.subr.mxu0 0.0
        %541 = vmatpush1.msra.mxu0 0.0
        %542 = vmatprep.subr.mxu0 0.0
        %543 = vmatpush1.msra.mxu0 0.0
        %544 = vmatprep.subr.mxu0 0.0
        %545 = vmatpush1.msra.mxu0 0.0
        %546 = vmatprep.subr.mxu0 0.0
        %547 = vmatpush1.msra.mxu0 0.0
        %548 = vmatprep.mubr.f32.mxu0 0.0
        %549 = vmatmul.mubr.f32.gmra.mrb[0].mxu0 %v482
        %v550 = vpop.f32.mrb[0].mxu0
        %v551 = vadd.f32 0.0, %v550
        %v552 = vpop.f32.mrb[0].mxu0
        %553 = vdwg.mxu0
        %554 = vst.msk [vmem:[%s373] sm:$0xff] %vm385, %v551
        %s555 = sand.u32 %s162, 1
        %s556 = scalar_lea.sflag [#allocation4], %s555
        %s557 = sand.u32 %s162, 1
        %s558 = smul.addr %s557, 8
        %s559 = scalar_lea.vmem [#allocation10], %s558
        %s560 = sand.u32 %s190, 1
        %s561 = scalar_lea.sflag [#allocation12], %s560
        %s562 = sand.u32 %s190, 1
        %s563 = smul.addr %s562, 8
        %s564 = scalar_lea.vmem [#allocation11], %s563
        // Predicated region
        $region53: #{tpu_custom_call.1} parent=35 // pred_check
          %p565 = pneg %p172
        $region54: #{tpu_custom_call.1} parent=35 // pred_check_branch
          %567 = sbr.rel (%p565) target = $region56
        $region55: #{tpu_custom_call.1} parent=35 // pred_region
          %s569 = ssub.s32 128, 128
          %570 = vsyncadd %s556, %s569
          %s571 = sadd.s32 %s37, %s36
          %s572 = smul.addr %s571, 128
          %s573 = scalar_lea.hbm %s4, %s572
          %s575 = sshll.u32 %s559, 4
          %s576 = int_to_ptr.vmem [resolvable:$true] %s575
          %578 = dma.vmem_to_hbm [thread:$0]  %s576, 128, %s573, %s556
        $region56: #{tpu_custom_call.1} parent=35 // pred_fallthru
          _
        // Predicated region
        $region57: #{tpu_custom_call.1} parent=35 // pred_check
          %p579 = pneg %p200
        $region58: #{tpu_custom_call.1} parent=35 // pred_check_branch
          %581 = sbr.rel (%p579) target = $region60
        $region59: #{tpu_custom_call.1} parent=35 // pred_region
          %s583 = ssub.s32 128, 128
          %584 = vsyncadd %s561, %s583
          %s585 = sadd.s32 %s37, %s36
          %s586 = smul.addr %s585, 128
          %s587 = scalar_lea.hbm %s5, %s586
          %s589 = sshll.u32 %s564, 4
          %s590 = int_to_ptr.vmem [resolvable:$true] %s589
          %592 = dma.vmem_to_hbm [thread:$0]  %s590, 128, %s587, %s561
        $region60: #{tpu_custom_call.1} parent=35 // pred_fallthru
          _
      $region36: #{tpu_custom_call.1} parent=5 // pred_fallthru
        _
      %p593 = scmp.le.s32.totalorder 2, %s27
      // Predicated region
      $region61: #{tpu_custom_call.1} parent=5 // pred_check
        %p594 = pneg %p593
      $region62: #{tpu_custom_call.1} parent=5 // pred_check_branch
        %596 = sbr.rel (%p594) target = $region64
      $region63: #{tpu_custom_call.1} parent=5 // pred_region
        %s597 = ssub.s32 %s27, 2
        // Predicated region
        $region65: #{tpu_custom_call.1} parent=63 // pred_check
          %p598 = pneg %p178
        $region66: #{tpu_custom_call.1} parent=63 // pred_check_branch
          %600 = sbr.rel (%p598) target = $region68
        $region67: #{tpu_custom_call.1} parent=63 // pred_region
          %s601 = sand.u32 %s163, 1
          %s602 = scalar_lea.sflag [#allocation4], %s601
          %s603 = sand.u32 %s163, 1
          %s604 = smul.addr %s603, 8
          %s605 = scalar_lea.vmem [#allocation10], %s604
          %606 = dma.done %s602, 128
        $region68: #{tpu_custom_call.1} parent=63 // pred_fallthru
          _
        // Predicated region
        $region69: #{tpu_custom_call.1} parent=63 // pred_check
          %p607 = pneg %p206
        $region70: #{tpu_custom_call.1} parent=63 // pred_check_branch
          %609 = sbr.rel (%p607) target = $region72
        $region71: #{tpu_custom_call.1} parent=63 // pred_region
          %s610 = sand.u32 %s191, 1
          %s611 = scalar_lea.sflag [#allocation12], %s610
          %s612 = sand.u32 %s191, 1
          %s613 = smul.addr %s612, 8
          %s614 = scalar_lea.vmem [#allocation11], %s613
          %615 = dma.done %s611, 128
        $region72: #{tpu_custom_call.1} parent=63 // pred_fallthru
          _
      $region64: #{tpu_custom_call.1} parent=5 // pred_fallthru
        _
    $region6: #{tpu_custom_call.1} parent=1 // loop_footer
      %s31 = sadd.s32 1, %s27
    $region7: #{tpu_custom_call.1} parent=1 // loop_footer_branch
      %26 = sbr.rel target = $region3
    $region8: #{tpu_custom_call.1} parent=1 // loop_exit
      _
    %616 = vsyncpa [#allocation3], 1
    %s617 = scalar_lea.sflag [#allocation3], 1
    %618 = vsyncpa %s617, 1
    %619 = vsyncpa [#allocation6], 1
    %s620 = scalar_lea.sflag [#allocation6], 1
    %621 = vsyncpa %s620, 1
    %622 = vsyncpa [#allocation9], 1
    %s623 = scalar_lea.sflag [#allocation9], 1
    %624 = vsyncpa %s623, 1
    %625 = vsyncpa [#allocation4], 1
    %s626 = scalar_lea.sflag [#allocation4], 1
    %627 = vsyncpa %s626, 1
    %628 = vsyncpa [#allocation12], 1
    %s629 = scalar_lea.sflag [#allocation12], 1
    %630 = vsyncpa %s629, 1

</llo_original>
